<compile_context>
chip_gen: v6e
topology: v6e:2x2x1
jax: 0.10.0
libtpu: 0.0.40
codegen_flags: <defaults>
</compile_context>

<pallas_src>
import jax
import jax.numpy as jnp
from jax.experimental import pallas as pl
from jax.experimental.pallas import tpu as pltpu


def _unet_block_kernel(x_ref, w1_ref, b1_ref, w2_ref, b2_ref, o_ref):
    """Fused conv1+bn1+relu -> conv2+bn2+relu for one block of batch images.

    x_ref  : (B, H, W*C_in)        bf16  channels-last rows
    w1_ref : (3*W*C_in,  W*C_out)  bf16  banded conv1 weights (dy folded into K, BN1 scale folded)
    b1_ref : (1, W*C_out)          f32   folded bias row
    w2_ref : (3*W*C_out, W*C_out)  bf16  banded conv2 weights (BN2 scale folded)
    b2_ref : (1, W*C_out)          f32   folded bias row
    o_ref  : (B, H, W*C_out)       bf16  lane-dense output rows
    """
    b, h, _ = x_ref.shape
    wcout = o_ref.shape[-1]

    def banded_lhs(rows):
        # rows: (B, H, WC) bf16 -> (B*H, 3*WC) = [row i-1 | row i | row i+1]
        # ('same' zero halo along H realized as zero rows; dx halo is baked into
        #  the banded weights).
        bb, hh, wc = rows.shape
        zero = jnp.zeros((bb, 1, wc), rows.dtype)
        up = jnp.concatenate([zero, rows[:, :hh - 1, :]], axis=1)   # x[i-1]
        dn = jnp.concatenate([rows[:, 1:, :], zero], axis=1)        # x[i+1]
        return jnp.concatenate([up, rows, dn], axis=-1).reshape(bb * hh, 3 * wc)

    # conv1 (+ folded BN1 scale): ONE MXU matmul, K = 3*W*C_in, f32 accumulate.
    acc1 = jnp.dot(banded_lhs(x_ref[...]), w1_ref[...],
                   preferred_element_type=jnp.float32)               # (B*H, W*C_out)
    # bias + ReLU epilogue in f32, single bf16 cast; intermediate never hits HBM.
    y1 = jnp.maximum(acc1 + b1_ref[...], 0.0).astype(jnp.bfloat16)

    # conv2 (+ folded BN2 scale): ONE MXU matmul, K = 3*W*C_out.
    acc2 = jnp.dot(banded_lhs(y1.reshape(b, h, wcout)), w2_ref[...],
                   preferred_element_type=jnp.float32)
    o_ref[...] = jnp.maximum(acc2 + b2_ref[...], 0.0).astype(o_ref.dtype).reshape(b, h, wcout)


def _fold_bn(conv_bias, gamma, beta, mean, var, eps):
    """Eval-mode BN folding: scale (into weights) and bias (conv bias absorbed)."""
    inv = gamma / jnp.sqrt(var + eps)
    return inv.astype(jnp.float32), (beta + (conv_bias - mean) * inv).astype(jnp.float32)


def _band_weights(w_hwio, scale, width):
    """Build a banded matrix of shape (3*width*C_in, width*C_out) such that
    [x[i-1] | x[i] | x[i+1]] (each image row flattened as W*C_in) @ M gives the
    conv output row (W*C_out).  The 3 dx taps and 'same' zero padding along W
    are folded in; the BN scale is folded into the weights.  K is ordered
    [dy, x, ci], matching the kernel's banded_lhs layout."""
    kh, kw, c_in, c_out = w_hwio.shape
    w = (w_hwio * scale[None, None, None, :]).astype(jnp.float32)
    xs = jnp.arange(width)
    ci = jnp.arange(c_in)
    co = jnp.arange(c_out)
    cols = xs[:, None] * c_out + co[None, :]                              # (W, C_out)
    mats = []
    for dy in range(kh):
        m = jnp.zeros((width * c_in, width * c_out), jnp.float32)
        for dx in range(kw):
            src = xs + dx - 1                                             # input col per output x
            valid = (src >= 0) & (src < width)
            rows = jnp.clip(src, 0, width - 1)[:, None] * c_in + ci[None, :]    # (W, C_in)
            # NOTE: out-of-range taps are masked to EXACT zeros *before* the
            # clipped-index scatter-add; keep this ordering (clip is only safe
            # because the masked values are zero).
            vals = jnp.where(valid[:, None, None], w[dy, dx][None, :, :], 0.0)  # (W, C_in, C_out)
            m = m.at[rows[:, :, None], cols[:, None, :]].add(vals)
        mats.append(m)
    return jnp.concatenate(mats, axis=0)                                  # (3*W*C_in, W*C_out)


def prepare_unet_block_params(params, width, eps=1e-5):
    """ONE-TIME parameter preparation (run once, reuse every forward call):
    banded bf16 conv weights with the eval-mode BN scale folded in, plus the
    folded f32 bias rows.  Keeps scatter-heavy construction off the fwd path."""
    c_out = params["w1"].shape[0]
    w1 = jnp.transpose(params["w1"], (2, 3, 1, 0))      # (Co,Ci,3,3) -> (3,3,Ci,Co)
    w2 = jnp.transpose(params["w2"], (2, 3, 1, 0))
    s1, b1 = _fold_bn(params["b1"], params["bn1_gamma"], params["bn1_beta"],
                      params["bn1_mean"], params["bn1_var"], eps)
    s2, b2 = _fold_bn(params["b2"], params["bn2_gamma"], params["bn2_beta"],
                      params["bn2_mean"], params["bn2_var"], eps)
    return {
        "w1_band": _band_weights(w1, s1, width).astype(jnp.bfloat16),   # (3*W*Ci, W*Co)
        "w2_band": _band_weights(w2, s2, width).astype(jnp.bfloat16),   # (3*W*Co, W*Co)
        "b1_row": jnp.tile(b1, width).reshape(1, width * c_out).astype(jnp.float32),
        "b2_row": jnp.tile(b2, width).reshape(1, width * c_out).astype(jnp.float32),
    }


def _pick_batch_block(n, h, target_m=128):
    """Largest divisor of n whose block gives M = block*h close to (<=) target_m."""
    want = max(1, target_m // h)
    best = 1
    for d in range(1, n + 1):
        if n % d == 0 and d <= want:
            best = d
    return best


def unet_block_forward(prepped, x_nchw):
    """UNetBlock.forward: relu(bn2(conv2(relu(bn1(conv1(x)))))) — NCHW in, NCHW bf16 out."""
    n, c_in, h, w = x_nchw.shape
    wcout = prepped["b1_row"].shape[-1]
    c_out = wcout // w
    assert prepped["w1_band"].shape == (3 * w * c_in, wcout)

    block_n = _pick_batch_block(n, h)           # M = block_n * h rows per matmul
    grid = (n // block_n,)

    # NCHW -> NHWC -> (N, H, W*C) channels-last rows; bf16 MXU/DMA operands.
    # TODO(synk): if the surrounding network is NHWC, drop these transposes.
    x_rows = jnp.transpose(x_nchw, (0, 2, 3, 1)).reshape(n, h, w * c_in).astype(jnp.bfloat16)

    out_rows = pl.pallas_call(
        _unet_block_kernel,
        out_shape=jax.ShapeDtypeStruct((n, h, wcout), jnp.bfloat16),
        grid=grid,
        in_specs=[
            pl.BlockSpec((block_n, h, w * c_in), lambda i: (i, 0, 0)),
            # Constant weight/bias blocks (index_map independent of the grid index).
            pl.BlockSpec((3 * w * c_in, wcout), lambda i: (0, 0)),
            pl.BlockSpec((1, wcout), lambda i: (0, 0)),
            pl.BlockSpec((3 * wcout, wcout), lambda i: (0, 0)),
            pl.BlockSpec((1, wcout), lambda i: (0, 0)),
        ],
        out_specs=pl.BlockSpec((block_n, h, wcout), lambda i: (i, 0, 0)),
        compiler_params=pltpu.CompilerParams(
            dimension_semantics=("parallel",),
            # Resident footprint is tiny here; re-derive (<~48 MiB) for v7x once
            # the banded weights / batch blocks are scaled up.
            vmem_limit_bytes=32 * 1024 * 1024),
    )(x_rows, prepped["w1_band"], prepped["b1_row"],
      prepped["w2_band"], prepped["b2_row"])

    out_nhwc = out_rows.reshape(n, h, w, c_out)
    return jnp.transpose(out_nhwc, (0, 3, 1, 2))                # NHWC -> NCHW (bf16)


def init_unet_block_params(key, in_channels, out_channels):
    ks = jax.random.split(key, 12)
    p = {}
    # Conv weights in PyTorch layout (C_out, C_in, 3, 3); bias (C_out,)
    p["w1"] = 0.1 * jax.random.normal(ks[0], (out_channels, in_channels, 3, 3), jnp.float32)
    p["b1"] = 0.1 * jax.random.normal(ks[1], (out_channels,), jnp.float32)
    p["w2"] = 0.1 * jax.random.normal(ks[2], (out_channels, out_channels, 3, 3), jnp.float32)
    p["b2"] = 0.1 * jax.random.normal(ks[3], (out_channels,), jnp.float32)
    # BatchNorm2d parameters + running stats (eval mode)
    p["bn1_gamma"] = 1.0 + 0.1 * jax.random.normal(ks[4], (out_channels,), jnp.float32)
    p["bn1_beta"]  = 0.1 * jax.random.normal(ks[5], (out_channels,), jnp.float32)
    p["bn1_mean"]  = 0.1 * jax.random.normal(ks[6], (out_channels,), jnp.float32)
    p["bn1_var"]   = 0.5 + jnp.abs(jax.random.normal(ks[7], (out_channels,), jnp.float32))
    p["bn2_gamma"] = 1.0 + 0.1 * jax.random.normal(ks[8], (out_channels,), jnp.float32)
    p["bn2_beta"]  = 0.1 * jax.random.normal(ks[9], (out_channels,), jnp.float32)
    p["bn2_mean"]  = 0.1 * jax.random.normal(ks[10], (out_channels,), jnp.float32)
    p["bn2_var"]   = 0.5 + jnp.abs(jax.random.normal(ks[11], (out_channels,), jnp.float32))
    return p


def reference_forward(params, x_nchw, eps=1e-5):
    """Pure-JAX (XLA) f32 reference of the same eval-mode forward pass."""
    def conv(x, w, b):
        y = jax.lax.conv_general_dilated(
            x, w, window_strides=(1, 1), padding="SAME",
            dimension_numbers=("NCHW", "OIHW", "NCHW"))
        return y + b[None, :, None, None]

    def bn(x, g, bt, m, v):
        return (g[None, :, None, None] * (x - m[None, :, None, None])
                / jnp.sqrt(v[None, :, None, None] + eps) + bt[None, :, None, None])

    y = jax.nn.relu(bn(conv(x_nchw, params["w1"], params["b1"]),
                       params["bn1_gamma"], params["bn1_beta"],
                       params["bn1_mean"], params["bn1_var"]))
    y = jax.nn.relu(bn(conv(y, params["w2"], params["b2"]),
                       params["bn2_gamma"], params["bn2_beta"],
                       params["bn2_mean"], params["bn2_var"]))
    return y


if __name__ == "__main__":
    key = jax.random.PRNGKey(0)
    kp, kx = jax.random.split(key)

    in_channels, out_channels = 4, 8
    N, H, W = 2, 16, 16          # W * out_channels = 128 -> lane-dense output rows

    params = init_unet_block_params(kp, in_channels, out_channels)
    x = jax.random.normal(kx, (N, in_channels, H, W), jnp.float32)

    # One-time parameter preparation (banded bf16 weights, folded BN) — off the
    # per-call critical path.
    prepped = jax.block_until_ready(prepare_unet_block_params(params, W))

    fwd = jax.jit(unet_block_forward)
    y = jax.block_until_ready(fwd(prepped, x))

    y_ref = reference_forward(params, x)
    assert y.shape == (N, out_channels, H, W), y.shape
    # bf16 MXU operands + bf16 intermediate/output (with f32 accumulation) bound
    # the tolerance vs the f32 reference.
    max_err = float(jnp.max(jnp.abs(y.astype(jnp.float32) - y_ref)))
    assert max_err < 1e-1, f"max abs err {max_err}"

    print("KERNEL_OK")
</pallas_src>

<mosaic_0001>
module attributes {stable_mosaic.version = 11 : i64} {
  func.func @_unet_block_kernel(%arg0: i32, %arg1: memref<2x16x64xbf16, #tpu.memory_space<vmem>>, %arg2: memref<192x128xbf16, #tpu.memory_space<vmem>>, %arg3: memref<1x128xf32, #tpu.memory_space<vmem>>, %arg4: memref<384x128xbf16, #tpu.memory_space<vmem>>, %arg5: memref<1x128xf32, #tpu.memory_space<vmem>>, %arg6: memref<2x16x128xbf16, #tpu.memory_space<vmem>>) attributes {dimension_semantics = [#tpu.dimension_semantics<parallel>], iteration_bounds = array<i64: 1>, scalar_prefetch = 0 : i64, scratch_operands = 0 : i64, tpu.core_type = #tpu.core_type<tc>, window_params = [{transform_indices = @transform_0, window_bounds = array<i64: 2, 16, 64>}, {pipeline_mode = #tpu.pipeline_mode<synchronous>, transform_indices = @transform_1, window_bounds = array<i64: 192, 128>}, {pipeline_mode = #tpu.pipeline_mode<synchronous>, transform_indices = @transform_2, window_bounds = array<i64: 1, 128>}, {pipeline_mode = #tpu.pipeline_mode<synchronous>, transform_indices = @transform_3, window_bounds = array<i64: 384, 128>}, {pipeline_mode = #tpu.pipeline_mode<synchronous>, transform_indices = @transform_4, window_bounds = array<i64: 1, 128>}, {transform_indices = @transform_5, window_bounds = array<i64: 2, 16, 128>}]} {
    %c0 = arith.constant 0 : index
    %c0_0 = arith.constant 0 : index
    %c0_1 = arith.constant 0 : index
    %0 = vector.load %arg1[%c0, %c0_0, %c0_1] : memref<2x16x64xbf16, #tpu.memory_space<vmem>>, vector<2x16x64xbf16>
    %cst = arith.constant 0.000000e+00 : bf16
    %1 = vector.broadcast %cst : bf16 to vector<2x1x64xbf16>
    %2 = vector.extract_strided_slice %0 {offsets = [0, 0, 0], sizes = [2, 15, 64], strides = [1, 1, 1]} : vector<2x16x64xbf16> to vector<2x15x64xbf16>
    %3 = tpu.concatenate %1, %2 in 1 : vector<2x1x64xbf16>, vector<2x15x64xbf16> -> vector<2x16x64xbf16>
    %4 = vector.extract_strided_slice %0 {offsets = [0, 1, 0], sizes = [2, 15, 64], strides = [1, 1, 1]} : vector<2x16x64xbf16> to vector<2x15x64xbf16>
    %5 = tpu.concatenate %4, %1 in 1 : vector<2x15x64xbf16>, vector<2x1x64xbf16> -> vector<2x16x64xbf16>
    %6 = tpu.concatenate %3, %0, %5 in 2 : vector<2x16x64xbf16>, vector<2x16x64xbf16>, vector<2x16x64xbf16> -> vector<2x16x192xbf16>
    %7 = vector.shape_cast %6 : vector<2x16x192xbf16> to vector<32x192xbf16>
    %c0_2 = arith.constant 0 : index
    %c0_3 = arith.constant 0 : index
    %8 = vector.load %arg2[%c0_2, %c0_3] : memref<192x128xbf16, #tpu.memory_space<vmem>>, vector<192x128xbf16>
    %cst_4 = arith.constant dense<0.000000e+00> : vector<32x128xf32>
    %9 = tpu.matmul %7, %8, %cst_4 {dimension_numbers = #tpu.dot_dimension_numbers<[1], [0], [0], [1], [0, 0, 1, 1], [], []>} : vector<32x192xbf16>, vector<192x128xbf16>, vector<32x128xf32> -> vector<32x128xf32>
    %c0_5 = arith.constant 0 : index
    %c0_6 = arith.constant 0 : index
    %10 = vector.load %arg3[%c0_5, %c0_6] : memref<1x128xf32, #tpu.memory_space<vmem>>, vector<1x128xf32>
    %11 = vector.broadcast %10 : vector<1x128xf32> to vector<32x128xf32>
    %12 = arith.addf %9, %11 : vector<32x128xf32>
    %cst_7 = arith.constant 0.000000e+00 : f32
    %13 = vector.broadcast %cst_7 : f32 to vector<32x128xf32>
    %14 = arith.maximumf %12, %13 : vector<32x128xf32>
    %15 = arith.truncf %14 : vector<32x128xf32> to vector<32x128xbf16>
    %16 = vector.shape_cast %15 : vector<32x128xbf16> to vector<2x16x128xbf16>
    %cst_8 = arith.constant 0.000000e+00 : bf16
    %17 = vector.broadcast %cst_8 : bf16 to vector<2x1x128xbf16>
    %18 = vector.extract_strided_slice %16 {offsets = [0, 0, 0], sizes = [2, 15, 128], strides = [1, 1, 1]} : vector<2x16x128xbf16> to vector<2x15x128xbf16>
    %19 = tpu.concatenate %17, %18 in 1 : vector<2x1x128xbf16>, vector<2x15x128xbf16> -> vector<2x16x128xbf16>
    %20 = vector.extract_strided_slice %16 {offsets = [0, 1, 0], sizes = [2, 15, 128], strides = [1, 1, 1]} : vector<2x16x128xbf16> to vector<2x15x128xbf16>
    %21 = tpu.concatenate %20, %17 in 1 : vector<2x15x128xbf16>, vector<2x1x128xbf16> -> vector<2x16x128xbf16>
    %22 = tpu.concatenate %19, %16, %21 in 2 : vector<2x16x128xbf16>, vector<2x16x128xbf16>, vector<2x16x128xbf16> -> vector<2x16x384xbf16>
    %23 = vector.shape_cast %22 : vector<2x16x384xbf16> to vector<32x384xbf16>
    %c0_9 = arith.constant 0 : index
    %c0_10 = arith.constant 0 : index
    %24 = vector.load %arg4[%c0_9, %c0_10] : memref<384x128xbf16, #tpu.memory_space<vmem>>, vector<384x128xbf16>
    %cst_11 = arith.constant dense<0.000000e+00> : vector<32x128xf32>
    %25 = tpu.matmul %23, %24, %cst_11 {dimension_numbers = #tpu.dot_dimension_numbers<[1], [0], [0], [1], [0, 0, 1, 1], [], []>} : vector<32x384xbf16>, vector<384x128xbf16>, vector<32x128xf32> -> vector<32x128xf32>
    %c0_12 = arith.constant 0 : index
    %c0_13 = arith.constant 0 : index
    %26 = vector.load %arg5[%c0_12, %c0_13] : memref<1x128xf32, #tpu.memory_space<vmem>>, vector<1x128xf32>
    %27 = vector.broadcast %26 : vector<1x128xf32> to vector<32x128xf32>
    %28 = arith.addf %25, %27 : vector<32x128xf32>
    %cst_14 = arith.constant 0.000000e+00 : f32
    %29 = vector.broadcast %cst_14 : f32 to vector<32x128xf32>
    %30 = arith.maximumf %28, %29 : vector<32x128xf32>
    %31 = arith.truncf %30 : vector<32x128xf32> to vector<32x128xbf16>
    %32 = vector.shape_cast %31 : vector<32x128xbf16> to vector<2x16x128xbf16>
    %c0_15 = arith.constant 0 : index
    %c0_16 = arith.constant 0 : index
    %c0_17 = arith.constant 0 : index
    %33 = vector.load %arg6[%c0_15, %c0_16, %c0_17] : memref<2x16x128xbf16, #tpu.memory_space<vmem>>, vector<2x16x128xbf16>
    tpu.vector_store %arg6[%c0_15, %c0_16, %c0_17], %32 {strides = array<i32>} : memref<2x16x128xbf16, #tpu.memory_space<vmem>>, vector<2x16x128xbf16>,
    return
  }
  func.func @transform_0(%arg0: i32) -> (i32, i32, i32) {
    %c0_i32 = arith.constant 0 : i32
    %c0_i32_0 = arith.constant 0 : i32
    %c0_i32_1 = arith.constant 0 : i32
    return %arg0, %c0_i32, %c0_i32_0 : i32, i32, i32
  }
  func.func @transform_1(%arg0: i32) -> (i32, i32) {
    %c0_i32 = arith.constant 0 : i32
    %c0_i32_0 = arith.constant 0 : i32
    %c0_i32_1 = arith.constant 0 : i32
    return %c0_i32, %c0_i32_0 : i32, i32
  }
  func.func @transform_2(%arg0: i32) -> (i32, i32) {
    %c0_i32 = arith.constant 0 : i32
    %c0_i32_0 = arith.constant 0 : i32
    %c0_i32_1 = arith.constant 0 : i32
    return %c0_i32, %c0_i32_0 : i32, i32
  }
  func.func @transform_3(%arg0: i32) -> (i32, i32) {
    %c0_i32 = arith.constant 0 : i32
    %c0_i32_0 = arith.constant 0 : i32
    %c0_i32_1 = arith.constant 0 : i32
    return %c0_i32, %c0_i32_0 : i32, i32
  }
  func.func @transform_4(%arg0: i32) -> (i32, i32) {
    %c0_i32 = arith.constant 0 : i32
    %c0_i32_0 = arith.constant 0 : i32
    %c0_i32_1 = arith.constant 0 : i32
    return %c0_i32, %c0_i32_0 : i32, i32
  }
  func.func @transform_5(%arg0: i32) -> (i32, i32, i32) {
    %c0_i32 = arith.constant 0 : i32
    %c0_i32_0 = arith.constant 0 : i32
    %c0_i32_1 = arith.constant 0 : i32
    return %arg0, %c0_i32, %c0_i32_0 : i32, i32, i32
  }
}

</mosaic_0001>

<llo_original>
// kernel: unet_block_forward.1
$region0: #{unet_block_forward.1}
  #allocation0 [shape = 'u32[]', space=smem, size = 0x4, offset = 0x4, fixed_abs, tag = 'smem constant byte address 0x4 - core index']
  #allocation1 [shape = 'u32[144,128]{1,0:T(1,128)}', space=vmem, size = 0x12000, scoped, tag = 'internal scratch']
  %s0 = inlined_call_operand.vmem [shape: bf16[2,16,64], index: 0, kind: input, shape index: {}]
  %s1 = inlined_call_operand.vmem [shape: bf16[192,128], index: 1, kind: input, shape index: {}]
  %s2 = inlined_call_operand.vmem [shape: f32[1,128], index: 2, kind: input, shape index: {}]
  %s3 = inlined_call_operand.vmem [shape: bf16[384,128], index: 3, kind: input, shape index: {}]
  %s4 = inlined_call_operand.vmem [shape: f32[1,128], index: 4, kind: input, shape index: {}]
  %s5 = inlined_call_operand.vmem [shape: bf16[2,16,128], index: 5, kind: output, shape index: {}]
  %s6 = sld [smem:[#allocation0]]
  $region30: #{unet_block_forward.1} parent=0
    _
  %s8 = ssub.s32 1, %s6
  %s9 = scalar_select 0, %s8, %s6
  // Predicated region
  $region2: #{unet_block_forward.1} parent=0 // pred_check
    _
  $region3: #{unet_block_forward.1} parent=0 // pred_check_branch
    %11 = sbr.rel (0) target = $region5
  $region4: #{unet_block_forward.1} parent=0 // pred_region
    _
  $region5: #{unet_block_forward.1} parent=0 // pred_fallthru
    _
  // Predicated region
  $region6: #{unet_block_forward.1} parent=0 // pred_check
    _
  $region7: #{unet_block_forward.1} parent=0 // pred_check_branch
    %13 = sbr.rel (0) target = $region9
  $region8: #{unet_block_forward.1} parent=0 // pred_region
    _
  $region9: #{unet_block_forward.1} parent=0 // pred_fallthru
    _
  // Predicated region
  $region10: #{unet_block_forward.1} parent=0 // pred_check
    _
  $region11: #{unet_block_forward.1} parent=0 // pred_check_branch
    %15 = sbr.rel (0) target = $region13
  $region12: #{unet_block_forward.1} parent=0 // pred_region
    _
  $region13: #{unet_block_forward.1} parent=0 // pred_fallthru
    _
  // Predicated region
  $region14: #{unet_block_forward.1} parent=0 // pred_check
    _
  $region15: #{unet_block_forward.1} parent=0 // pred_check_branch
    %17 = sbr.rel (0) target = $region17
  $region16: #{unet_block_forward.1} parent=0 // pred_region
    _
  $region17: #{unet_block_forward.1} parent=0 // pred_fallthru
    _
  // Predicated region
  $region18: #{unet_block_forward.1} parent=0 // pred_check
    _
  $region19: #{unet_block_forward.1} parent=0 // pred_check_branch
    %19 = sbr.rel (0) target = $region21
  $region20: #{unet_block_forward.1} parent=0 // pred_region
    _
  $region21: #{unet_block_forward.1} parent=0 // pred_fallthru
    _
  %v21 = vld [vmem:[%s0] sm:$0xf]
  %v22 = vld [vmem:[%s0 + $0x4] sm:$0xf]
  %v23 = vld [vmem:[%s0 + $0x8] sm:$0xf]
  %v24 = vld [vmem:[%s0 + $0xc] sm:$0xf]
  %v29 = vunpack.c.l.b16 %v21
  %v30 = vunpack.c.l.b16 %v22
  %v31 = vunpack.c.l.b16 %v23
  %v32 = vunpack.c.l.b16 %v24
  %v33 = vpack.c.b16 %v30, %v29
  %v34 = vpack.c.b16 %v32, %v31
  %v36 = vshrl.u32 %v33, 16
  %v38 = vrot.slane %v36, 7
  %v39 = vshll.u32 %v33, 16
  %v41 = vor.u32 %v38, %v39
  %v43 = vshrl.u32 %v34, 16
  %v45 = vrot.slane %v43, 7
  %v46 = vshll.u32 %v34, 16
  %v48 = vor.u32 %v45, %v46
  %vm51 = vcmask 1040384
  %vm52 = vsmask.f32 256
  %vm53 = vmand %vm51, %vm52
  %v54 = vsel %vm53, 0, %v41
  %v55 = vsel %vm53, 0, %v48
  %v56 = vrot.slane %v39, 1
  %v57 = vor.u32 %v36, %v56
  %v58 = vrot.slane %v46, 1
  %v59 = vor.u32 %v43, %v58
  %vm62 = vcmask 1047552
  %vm63 = vsmask.f32 7424
  %vm64 = vmand %vm62, %vm63
  %v65 = vsel %vm64, %v57, 0
  %v66 = vsel %vm64, %v59, 0
  %67 = vrot.lane.b32.xlu0 %v33, 64
  %v68 = vpop.permute.xlu0 %67
  %69 = vrot.lane.b32.xlu0 %v34, 64
  %v70 = vpop.permute.xlu0 %69
  %vm71 = vcmask 523264
  %v74 = vsel %vm71, %v54, %v68
  %v78 = vsel %vm71, %v55, %v70
  %v80 = vld [vmem:[%s1] sm:$0xf]
  %v81 = vld [vmem:[%s1 + $0x4] sm:$0xf]
  %v82 = vld [vmem:[%s1 + $0x8] sm:$0xf]
  %v83 = vld [vmem:[%s1 + $0xc] sm:$0xf]
  %v84 = vld [vmem:[%s1 + $0x10] sm:$0xf]
  %v85 = vld [vmem:[%s1 + $0x14] sm:$0xf]
  %v86 = vld [vmem:[%s1 + $0x18] sm:$0xf]
  %v87 = vld [vmem:[%s1 + $0x1c] sm:$0xf]
  %v88 = vld [vmem:[%s1 + $0x20] sm:$0xf]
  %v89 = vld [vmem:[%s1 + $0x24] sm:$0xf]
  %v90 = vld [vmem:[%s1 + $0x28] sm:$0xf]
  %v91 = vld [vmem:[%s1 + $0x2c] sm:$0xf]
  %v92 = vld [vmem:[%s1 + $0x30] sm:$0xf]
  %v93 = vld [vmem:[%s1 + $0x34] sm:$0xf]
  %v94 = vld [vmem:[%s1 + $0x38] sm:$0xf]
  %v95 = vld [vmem:[%s1 + $0x3c] sm:$0xf]
  %v96 = vld [vmem:[%s1 + $0x40] sm:$0xf]
  %v97 = vld [vmem:[%s1 + $0x44] sm:$0xf]
  %v98 = vld [vmem:[%s1 + $0x48] sm:$0xf]
  %v99 = vld [vmem:[%s1 + $0x4c] sm:$0xf]
  %v100 = vld [vmem:[%s1 + $0x50] sm:$0xf]
  %v101 = vld [vmem:[%s1 + $0x54] sm:$0xf]
  %v102 = vld [vmem:[%s1 + $0x58] sm:$0xf]
  %v103 = vld [vmem:[%s1 + $0x5c] sm:$0xf]
  %v104 = vld [vmem:[%s2] sm:$0x1]
  %v106 = vlaneseq
  %v107 = vshrl.u32 %v106, 7
  %v108 = vsub.s32 0, %v107
  %v109 = vrot.slane %v104, %v108
  %v135 = vunpack.c.l.b16 %v80
  %v136 = vunpack.c.l.b16 %v81
  %v137 = vunpack.c.l.b16 %v82
  %v138 = vunpack.c.l.b16 %v83
  %v139 = vunpack.c.l.b16 %v84
  %v140 = vunpack.c.l.b16 %v85
  %v141 = vunpack.c.l.b16 %v86
  %v142 = vunpack.c.l.b16 %v87
  %v143 = vunpack.c.l.b16 %v88
  %v144 = vunpack.c.l.b16 %v89
  %v145 = vunpack.c.l.b16 %v90
  %v146 = vunpack.c.l.b16 %v91
  %v147 = vunpack.c.l.b16 %v92
  %v148 = vunpack.c.l.b16 %v93
  %v149 = vunpack.c.l.b16 %v94
  %v150 = vunpack.c.l.b16 %v95
  %v151 = vunpack.c.l.b16 %v96
  %v152 = vunpack.c.l.b16 %v97
  %v153 = vunpack.c.l.b16 %v98
  %v154 = vunpack.c.l.b16 %v99
  %v155 = vunpack.c.l.b16 %v100
  %v156 = vunpack.c.l.b16 %v101
  %v157 = vunpack.c.l.b16 %v102
  %v158 = vunpack.c.l.b16 %v103
  %v159 = vpack.c.b16 %v136, %v135
  %v160 = vpack.c.b16 %v138, %v137
  %v161 = vpack.c.b16 %v140, %v139
  %v162 = vpack.c.b16 %v142, %v141
  %v163 = vpack.c.b16 %v144, %v143
  %v164 = vpack.c.b16 %v146, %v145
  %v165 = vpack.c.b16 %v148, %v147
  %v166 = vpack.c.b16 %v150, %v149
  %v167 = vpack.c.b16 %v152, %v151
  %v168 = vpack.c.b16 %v154, %v153
  %v169 = vpack.c.b16 %v156, %v155
  %v170 = vpack.c.b16 %v158, %v157
  %v184 = vsel %vm71, %v65, 0
  %v187 = vsel %vm71, %v66, 0
  %189 = vmatprep.subr.bf16.mxu0 0
  %190 = vmatpush1.bf16.msra.mxu0 %v166
  %191 = vmatprep.subr.bf16.mxu0 0
  %192 = vmatpush1.bf16.msra.mxu0 %v165
  %193 = vmatprep.subr.bf16.mxu0 0
  %194 = vmatpush1.bf16.msra.mxu0 %v164
  %195 = vmatprep.subr.bf16.mxu0 0
  %196 = vmatpush1.bf16.msra.mxu0 %v163
  %197 = vmatprep.subr.bf16.mxu0 0
  %198 = vmatpush1.bf16.msra.mxu0 %v162
  %199 = vmatprep.subr.bf16.mxu0 0
  %200 = vmatpush1.bf16.msra.mxu0 %v161
  %201 = vmatprep.subr.bf16.mxu0 0
  %202 = vmatpush1.bf16.msra.mxu0 %v160
  %203 = vmatprep.subr.bf16.mxu0 0
  %204 = vmatpush1.bf16.msra.mxu0 %v159
  %205 = vmatprep.subr.bf16.mxu0 0
  %206 = vmatpush2.bf16.msra.mxu0 0
  %207 = vmatprep.subr.bf16.mxu0 0
  %208 = vmatpush2.bf16.msra.mxu0 0
  %209 = vmatprep.subr.bf16.mxu0 0
  %210 = vmatpush2.bf16.msra.mxu0 0
  %211 = vmatprep.subr.bf16.mxu0 0
  %212 = vmatpush2.bf16.msra.mxu0 0
  %213 = vmatprep.subr.bf16.mxu0 0
  %214 = vmatpush2.bf16.msra.mxu0 %v170
  %215 = vmatprep.subr.bf16.mxu0 0
  %216 = vmatpush2.bf16.msra.mxu0 %v169
  %217 = vmatprep.subr.bf16.mxu0 0
  %218 = vmatpush2.bf16.msra.mxu0 %v168
  %219 = vmatprep.subr.bf16.mxu0 0
  %220 = vmatpush2.bf16.msra.mxu0 %v167
  %221 = vmatprep.mubr.bf16.mxu0 %v184
  %222 = vmatmul.mubr.bf16.gmra.mxu0 %v74
  %v223 = vpop.f32.mrf.mxu0
  %v224 = vadd.f32 %v109, %v223
  %v225 = vpop.f32.mrf.mxu0
  %v226 = vpop.f32.mrf.mxu0
  %v227 = vadd.f32 %v109, %v226
  %v228 = vpop.f32.mrf.mxu0
  %229 = vmatprep.mubr.bf16.mxu0 %v187
  %230 = vmatmul.mubr.bf16.gmra.mxu0 %v78
  %v231 = vpop.f32.mrf.mxu0
  %v232 = vadd.f32 %v109, %v231
  %v233 = vpop.f32.mrf.mxu0
  %v234 = vpop.f32.mrf.mxu0
  %v235 = vadd.f32 %v109, %v234
  %v236 = vpop.f32.mrf.mxu0
  %237 = vdwg.mxu0
  %v238 = vmax.f32 %v224, 0.0
  %v239 = vmax.f32 %v227, 0.0
  %v240 = vmax.f32 %v232, 0.0
  %v241 = vmax.f32 %v235, 0.0
  %v242 = vpack.c.bf16 %v239, %v238
  %v243 = vpack.c.bf16 %v241, %v240
  %v245 = vshrl.u32 %v242, 16
  %v247 = vrot.slane %v245, 7
  %v248 = vshll.u32 %v242, 16
  %v250 = vor.u32 %v247, %v248
  %v252 = vshrl.u32 %v243, 16
  %v254 = vrot.slane %v252, 7
  %v255 = vshll.u32 %v243, 16
  %v257 = vor.u32 %v254, %v255
  %v260 = vsel %vm53, 0, %v250
  %v261 = vsel %vm53, 0, %v257
  %v262 = vrot.slane %v248, 1
  %v263 = vor.u32 %v245, %v262
  %v264 = vrot.slane %v255, 1
  %v265 = vor.u32 %v252, %v264
  %v268 = vsel %vm64, %v263, 0
  %v269 = vsel %vm64, %v265, 0
  %v270 = vld [vmem:[%s3] sm:$0xf]
  %v271 = vld [vmem:[%s3 + $0x4] sm:$0xf]
  %v272 = vld [vmem:[%s3 + $0x8] sm:$0xf]
  %v273 = vld [vmem:[%s3 + $0xc] sm:$0xf]
  %v274 = vld [vmem:[%s3 + $0x10] sm:$0xf]
  %v275 = vld [vmem:[%s3 + $0x14] sm:$0xf]
  %v276 = vld [vmem:[%s3 + $0x18] sm:$0xf]
  %v277 = vld [vmem:[%s3 + $0x1c] sm:$0xf]
  %v278 = vld [vmem:[%s3 + $0x20] sm:$0xf]
  %v279 = vld [vmem:[%s3 + $0x24] sm:$0xf]
  %v280 = vld [vmem:[%s3 + $0x28] sm:$0xf]
  %v281 = vld [vmem:[%s3 + $0x2c] sm:$0xf]
  %v282 = vld [vmem:[%s3 + $0x30] sm:$0xf]
  %v283 = vld [vmem:[%s3 + $0x34] sm:$0xf]
  %v284 = vld [vmem:[%s3 + $0x38] sm:$0xf]
  %v285 = vld [vmem:[%s3 + $0x3c] sm:$0xf]
  %v286 = vld [vmem:[%s3 + $0x40] sm:$0xf]
  %v287 = vld [vmem:[%s3 + $0x44] sm:$0xf]
  %v288 = vld [vmem:[%s3 + $0x48] sm:$0xf]
  %v289 = vld [vmem:[%s3 + $0x4c] sm:$0xf]
  %v290 = vld [vmem:[%s3 + $0x50] sm:$0xf]
  %v291 = vld [vmem:[%s3 + $0x54] sm:$0xf]
  %v292 = vld [vmem:[%s3 + $0x58] sm:$0xf]
  %v293 = vld [vmem:[%s3 + $0x5c] sm:$0xf]
  %v294 = vld [vmem:[%s3 + $0x60] sm:$0xf]
  %v295 = vld [vmem:[%s3 + $0x64] sm:$0xf]
  %v296 = vld [vmem:[%s3 + $0x68] sm:$0xf]
  %v297 = vld [vmem:[%s3 + $0x6c] sm:$0xf]
  %v298 = vld [vmem:[%s3 + $0x70] sm:$0xf]
  %v299 = vld [vmem:[%s3 + $0x74] sm:$0xf]
  %v300 = vld [vmem:[%s3 + $0x78] sm:$0xf]
  %v301 = vld [vmem:[%s3 + $0x7c] sm:$0xf]
  %v302 = vld [vmem:[%s3 + $0x80] sm:$0xf]
  %v303 = vld [vmem:[%s3 + $0x84] sm:$0xf]
  %v304 = vld [vmem:[%s3 + $0x88] sm:$0xf]
  %v305 = vld [vmem:[%s3 + $0x8c] sm:$0xf]
  %v306 = vld [vmem:[%s3 + $0x90] sm:$0xf]
  %v307 = vld [vmem:[%s3 + $0x94] sm:$0xf]
  %v308 = vld [vmem:[%s3 + $0x98] sm:$0xf]
  %v309 = vld [vmem:[%s3 + $0x9c] sm:$0xf]
  %v310 = vld [vmem:[%s3 + $0xa0] sm:$0xf]
  %v311 = vld [vmem:[%s3 + $0xa4] sm:$0xf]
  %v312 = vld [vmem:[%s3 + $0xa8] sm:$0xf]
  %v313 = vld [vmem:[%s3 + $0xac] sm:$0xf]
  %v314 = vld [vmem:[%s3 + $0xb0] sm:$0xf]
  %v315 = vld [vmem:[%s3 + $0xb4] sm:$0xf]
  %v316 = vld [vmem:[%s3 + $0xb8] sm:$0xf]
  %v317 = vld [vmem:[%s3 + $0xbc] sm:$0xf]
  %v318 = vld [vmem:[%s4] sm:$0x1]
  %v320 = vlaneseq
  %v321 = vshrl.u32 %v320, 7
  %v322 = vsub.s32 0, %v321
  %v323 = vrot.slane %v318, %v322
  %v373 = vunpack.c.l.b16 %v270
  %v374 = vunpack.c.l.b16 %v271
  %v375 = vunpack.c.l.b16 %v272
  %v376 = vunpack.c.l.b16 %v273
  %v377 = vunpack.c.l.b16 %v274
  %v378 = vunpack.c.l.b16 %v275
  %v379 = vunpack.c.l.b16 %v276
  %v380 = vunpack.c.l.b16 %v277
  %v381 = vunpack.c.l.b16 %v278
  %v382 = vunpack.c.l.b16 %v279
  %v383 = vunpack.c.l.b16 %v280
  %v384 = vunpack.c.l.b16 %v281
  %v385 = vunpack.c.l.b16 %v282
  %v386 = vunpack.c.l.b16 %v283
  %v387 = vunpack.c.l.b16 %v284
  %v388 = vunpack.c.l.b16 %v285
  %v389 = vunpack.c.l.b16 %v286
  %v390 = vunpack.c.l.b16 %v287
  %v391 = vunpack.c.l.b16 %v288
  %v392 = vunpack.c.l.b16 %v289
  %v393 = vunpack.c.l.b16 %v290
  %v394 = vunpack.c.l.b16 %v291
  %v395 = vunpack.c.l.b16 %v292
  %v396 = vunpack.c.l.b16 %v293
  %v397 = vunpack.c.l.b16 %v294
  %v398 = vunpack.c.l.b16 %v295
  %v399 = vunpack.c.l.b16 %v296
  %v400 = vunpack.c.l.b16 %v297
  %v401 = vunpack.c.l.b16 %v298
  %v402 = vunpack.c.l.b16 %v299
  %v403 = vunpack.c.l.b16 %v300
  %v404 = vunpack.c.l.b16 %v301
  %v405 = vunpack.c.l.b16 %v302
  %v406 = vunpack.c.l.b16 %v303
  %v407 = vunpack.c.l.b16 %v304
  %v408 = vunpack.c.l.b16 %v305
  %v409 = vunpack.c.l.b16 %v306
  %v410 = vunpack.c.l.b16 %v307
  %v411 = vunpack.c.l.b16 %v308
  %v412 = vunpack.c.l.b16 %v309
  %v413 = vunpack.c.l.b16 %v310
  %v414 = vunpack.c.l.b16 %v311
  %v415 = vunpack.c.l.b16 %v312
  %v416 = vunpack.c.l.b16 %v313
  %v417 = vunpack.c.l.b16 %v314
  %v418 = vunpack.c.l.b16 %v315
  %v419 = vunpack.c.l.b16 %v316
  %v420 = vunpack.c.l.b16 %v317
  %v421 = vpack.c.b16 %v374, %v373
  %v422 = vpack.c.b16 %v376, %v375
  %v423 = vpack.c.b16 %v378, %v377
  %v424 = vpack.c.b16 %v380, %v379
  %v425 = vpack.c.b16 %v382, %v381
  %v426 = vpack.c.b16 %v384, %v383
  %v427 = vpack.c.b16 %v386, %v385
  %v428 = vpack.c.b16 %v388, %v387
  %v429 = vpack.c.b16 %v390, %v389
  %v430 = vpack.c.b16 %v392, %v391
  %v431 = vpack.c.b16 %v394, %v393
  %v432 = vpack.c.b16 %v396, %v395
  %v433 = vpack.c.b16 %v398, %v397
  %v434 = vpack.c.b16 %v400, %v399
  %v435 = vpack.c.b16 %v402, %v401
  %v436 = vpack.c.b16 %v404, %v403
  %v437 = vpack.c.b16 %v406, %v405
  %v438 = vpack.c.b16 %v408, %v407
  %v439 = vpack.c.b16 %v410, %v409
  %v440 = vpack.c.b16 %v412, %v411
  %v441 = vpack.c.b16 %v414, %v413
  %v442 = vpack.c.b16 %v416, %v415
  %v443 = vpack.c.b16 %v418, %v417
  %v444 = vpack.c.b16 %v420, %v419
  %469 = vmatprep.subr.bf16.mxu0 0
  %470 = vmatpush1.bf16.msra.mxu0 %v428
  %471 = vmatprep.subr.bf16.mxu0 0
  %472 = vmatpush1.bf16.msra.mxu0 %v427
  %473 = vmatprep.subr.bf16.mxu0 0
  %474 = vmatpush1.bf16.msra.mxu0 %v426
  %475 = vmatprep.subr.bf16.mxu0 0
  %476 = vmatpush1.bf16.msra.mxu0 %v425
  %477 = vmatprep.subr.bf16.mxu0 0
  %478 = vmatpush1.bf16.msra.mxu0 %v424
  %479 = vmatprep.subr.bf16.mxu0 0
  %480 = vmatpush1.bf16.msra.mxu0 %v423
  %481 = vmatprep.subr.bf16.mxu0 0
  %482 = vmatpush1.bf16.msra.mxu0 %v422
  %483 = vmatprep.subr.bf16.mxu0 0
  %484 = vmatpush1.bf16.msra.mxu0 %v421
  %485 = vmatprep.subr.bf16.mxu0 0
  %486 = vmatpush2.bf16.msra.mxu0 %v436
  %487 = vmatprep.subr.bf16.mxu0 0
  %488 = vmatpush2.bf16.msra.mxu0 %v435
  %489 = vmatprep.subr.bf16.mxu0 0
  %490 = vmatpush2.bf16.msra.mxu0 %v434
  %491 = vmatprep.subr.bf16.mxu0 0
  %492 = vmatpush2.bf16.msra.mxu0 %v433
  %493 = vmatprep.subr.bf16.mxu0 0
  %494 = vmatpush2.bf16.msra.mxu0 %v432
  %495 = vmatprep.subr.bf16.mxu0 0
  %496 = vmatpush2.bf16.msra.mxu0 %v431
  %497 = vmatprep.subr.bf16.mxu0 0
  %498 = vmatpush2.bf16.msra.mxu0 %v430
  %499 = vmatprep.subr.bf16.mxu0 0
  %500 = vmatpush2.bf16.msra.mxu0 %v429
  %501 = vmatprep.mubr.bf16.mxu0 %v242
  %502 = vmatmul.mubr.bf16.gmra.mxu0 %v260
  %v503 = vpop.f32.mrf.mxu0
  %v504 = vadd.f32 %v323, %v503
  %v505 = vpop.f32.mrf.mxu0
  %v506 = vpop.f32.mrf.mxu0
  %v507 = vadd.f32 %v323, %v506
  %v508 = vpop.f32.mrf.mxu0
  %509 = vmatprep.mubr.bf16.mxu0 %v243
  %510 = vmatmul.mubr.bf16.gmra.mxu0 %v261
  %v511 = vpop.f32.mrf.mxu0
  %v512 = vadd.f32 %v323, %v511
  %v513 = vpop.f32.mrf.mxu0
  %v514 = vpop.f32.mrf.mxu0
  %v515 = vadd.f32 %v323, %v514
  %v516 = vpop.f32.mrf.mxu0
  %517 = vdwg.mxu0
  %518 = vmatprep.subr.bf16.mxu0 0
  %519 = vmatpush1.bf16.msra.mxu0 %v444
  %520 = vmatprep.subr.bf16.mxu0 0
  %521 = vmatpush1.bf16.msra.mxu0 %v443
  %522 = vmatprep.subr.bf16.mxu0 0
  %523 = vmatpush1.bf16.msra.mxu0 %v442
  %524 = vmatprep.subr.bf16.mxu0 0
  %525 = vmatpush1.bf16.msra.mxu0 %v441
  %526 = vmatprep.subr.bf16.mxu0 0
  %527 = vmatpush1.bf16.msra.mxu0 %v440
  %528 = vmatprep.subr.bf16.mxu0 0
  %529 = vmatpush1.bf16.msra.mxu0 %v439
  %530 = vmatprep.subr.bf16.mxu0 0
  %531 = vmatpush1.bf16.msra.mxu0 %v438
  %532 = vmatprep.subr.bf16.mxu0 0
  %533 = vmatpush1.bf16.msra.mxu0 %v437
  %534 = vmatprep.subr.bf16.mxu0 0
  %535 = vmatpush2.bf16.msra.mxu0 0
  %536 = vmatprep.subr.bf16.mxu0 0
  %537 = vmatpush2.bf16.msra.mxu0 0
  %538 = vmatprep.subr.bf16.mxu0 0
  %539 = vmatpush2.bf16.msra.mxu0 0
  %540 = vmatprep.subr.bf16.mxu0 0
  %541 = vmatpush2.bf16.msra.mxu0 0
  %542 = vmatprep.subr.bf16.mxu0 0
  %543 = vmatpush2.bf16.msra.mxu0 0
  %544 = vmatprep.subr.bf16.mxu0 0
  %545 = vmatpush2.bf16.msra.mxu0 0
  %546 = vmatprep.subr.bf16.mxu0 0
  %547 = vmatpush2.bf16.msra.mxu0 0
  %548 = vmatprep.subr.bf16.mxu0 0
  %549 = vmatpush2.bf16.msra.mxu0 0
  %550 = vmatprep.mubr.bf16.mxu0 0
  %551 = vmatmul.mubr.bf16.gmra.mxu0 %v268
  %v552 = vpop.f32.mrf.mxu0
  %v553 = vadd.f32 %v504, %v552
  %v554 = vpop.f32.mrf.mxu0
  %v555 = vpop.f32.mrf.mxu0
  %v556 = vadd.f32 %v507, %v555
  %v557 = vpop.f32.mrf.mxu0
  %558 = vmatprep.mubr.bf16.mxu0 0
  %559 = vmatmul.mubr.bf16.gmra.mxu0 %v269
  %v560 = vpop.f32.mrf.mxu0
  %v561 = vadd.f32 %v512, %v560
  %v562 = vpop.f32.mrf.mxu0
  %v563 = vpop.f32.mrf.mxu0
  %v564 = vadd.f32 %v515, %v563
  %v565 = vpop.f32.mrf.mxu0
  %566 = vdwg.mxu0
  %v567 = vmax.f32 %v553, 0.0
  %v568 = vmax.f32 %v556, 0.0
  %v569 = vmax.f32 %v561, 0.0
  %v570 = vmax.f32 %v564, 0.0
  %v571 = vpack.c.bf16 %v568, %v567
  %v572 = vpack.c.bf16 %v570, %v569
  %v575 = vunpack.c.l.b16 %v571
  %v576 = vunpack.c.h.b16 %v571
  %v577 = vunpack.c.l.b16 %v572
  %v578 = vunpack.c.h.b16 %v572
  %v579 = vpack.c.b16 %v575, %v575
  %v580 = vpack.c.b16 %v576, %v576
  %v581 = vpack.c.b16 %v577, %v577
  %v582 = vpack.c.b16 %v578, %v578
  %587 = vst [vmem:[%s5] sm:$0xf] %v579
  %588 = vst [vmem:[%s5 + $0x4] sm:$0xf] %v580
  %589 = vst [vmem:[%s5 + $0x8] sm:$0xf] %v581
  %590 = vst [vmem:[%s5 + $0xc] sm:$0xf] %v582
  // Predicated region
  $region22: #{unet_block_forward.1} parent=0 // pred_check
    _
  $region23: #{unet_block_forward.1} parent=0 // pred_check_branch
    %592 = sbr.rel (0) target = $region25
  $region24: #{unet_block_forward.1} parent=0 // pred_region
    _
  $region25: #{unet_block_forward.1} parent=0 // pred_fallthru
    _
  // Predicated region
  $region26: #{unet_block_forward.1} parent=0 // pred_check
    _
  $region27: #{unet_block_forward.1} parent=0 // pred_check_branch
    %594 = sbr.rel (0) target = $region29
  $region28: #{unet_block_forward.1} parent=0 // pred_region
    _
  $region29: #{unet_block_forward.1} parent=0 // pred_fallthru
    _

</llo_original>
